<compile_context>
chip_gen: v7x
topology: tpu7x:2x2x1
jax: 0.10.0
libtpu: 0.0.40
codegen_flags: <defaults>
</compile_context>

<pallas_src>
from functools import partial

import jax
import jax.numpy as jnp
from jax.experimental import pallas as pl
from jax.experimental.pallas import tpu as pltpu


def _e2e_kernel(wpack_ref, bias_ref, e_ref, a_ref, out_ref):
    # wpack_ref: (2*OC, C*d)  rows [0:OC] = W2f (row branch), [OC:] = W1f (col branch)
    # bias_ref : (OC, 1)      b1 + b2
    # e_ref    : (2*d, d*d)   stacked 0/1 selection matrix [e_row; e_col]
    # a_ref    : (2, C*d, d)  slab 0 = A_row layout, slab 1 = A_col layout
    # out_ref  : (OC, d*d)    lane-dense output slab
    oc = bias_ref.shape[0]

    wp = wpack_ref[...]                      # (2*OC, C*d), one load, sublane-aligned slices
    a_row = a_ref[0]                         # (C*d, d)
    a_col = a_ref[1]                         # (C*d, d)

    # rowpart[o, i] = sum_{c,k} W2[o,c,k] * A[c,i,k]  (+ bias, folded once per element)
    rowpart = jnp.dot(wp[:oc, :], a_row,
                      preferred_element_type=jnp.float32) + bias_ref[...]   # (OC, d)
    # colpart[o, j] = sum_{c,k} W1[o,c,k] * A[c,k,j]
    colpart = jnp.dot(wp[oc:, :], a_col,
                      preferred_element_type=jnp.float32)                    # (OC, d)

    # Fused broadcast: out[o, i*d + j] = rowpart[o, i] + colpart[o, j]
    rowcol = jnp.concatenate([rowpart, colpart], axis=1)                     # (OC, 2d)
    out_ref[...] = jnp.dot(rowcol, e_ref[...],
                           preferred_element_type=jnp.float32)               # (OC, d*d)


@partial(jax.jit, static_argnames=("in_channel", "out_channel", "nodes", "d"))
def e2e_forward(A, W1, b1, W2, b2, *, in_channel, out_channel, nodes, d):
    """A reshapeable to (B, in_channel, nodes, nodes). Returns (B, OC, d, d)."""
    assert nodes == d, "E2E forward only type-checks when nodes == d"
    C, OC = in_channel, out_channel
    CK = C * d
    B = A.size // (C * nodes * nodes)

    # --- activations: both contraction layouts, stacked into one input ---------
    A4 = A.reshape(B, C, d, d).astype(jnp.float32)
    A_col = A4.reshape(B, CK, d)                             # A_col[b, c*d+k, j] = A[b,c,k,j]
    A_row = A4.transpose(0, 1, 3, 2).reshape(B, CK, d)       # A_row[b, c*d+k, i] = A[b,c,i,k]
    A_pack = jnp.stack([A_row, A_col], axis=1)               # (B, 2, C*d, d)

    # --- parameters (constant-foldable / hoisted under jit) --------------------
    W1f = W1.reshape(OC, CK).astype(jnp.float32)             # W1f[o, c*d+k] = W1[o,c,k,0]
    W2f = W2.reshape(OC, CK).astype(jnp.float32)             # W2f[o, c*d+k] = W2[o,c,0,k]
    Wpack = jnp.concatenate([W2f, W1f], axis=0)              # (2*OC, C*d)
    bias = (b1 + b2).reshape(OC, 1).astype(jnp.float32)      # (OC, 1)

    # Stacked 0/1 expansion matrix E (2d, d*d): out = [rowpart|colpart] @ E.
    n = jnp.arange(d * d)
    k = jnp.arange(d)[:, None]
    e_row = ((n // d)[None, :] == k).astype(jnp.float32)     # selects i(n) == k
    e_col = ((n % d)[None, :] == k).astype(jnp.float32)      # selects j(n) == k
    E = jnp.concatenate([e_row, e_col], axis=0)              # (2d, d*d)

    flops = B * (2 * (2 * OC * CK * d) + OC * d + 2 * OC * (2 * d) * (d * d))
    bytes_accessed = 4 * (2 * OC * CK + OC + 2 * d * d * d) \
        + B * 4 * (2 * CK * d + OC * d * d)

    out = pl.pallas_call(
        _e2e_kernel,
        out_shape=jax.ShapeDtypeStruct((B, OC, d * d), jnp.float32),
        grid=(B,),
        in_specs=[
            pl.BlockSpec((2 * OC, CK), lambda b: (0, 0)),        # Wpack (broadcast)
            pl.BlockSpec((OC, 1), lambda b: (0, 0)),             # bias  (broadcast)
            pl.BlockSpec((2 * d, d * d), lambda b: (0, 0)),      # E     (broadcast)
            pl.BlockSpec((None, 2, CK, d), lambda b: (b, 0, 0, 0)),  # A_pack (per-batch)
        ],
        out_specs=pl.BlockSpec((None, OC, d * d), lambda b: (b, 0, 0)),
        compiler_params=pltpu.CompilerParams(dimension_semantics=("parallel",)),
        cost_estimate=pl.CostEstimate(flops=flops, transcendentals=0,
                                      bytes_accessed=bytes_accessed),
    )(Wpack, bias, E, A_pack)

    return out.reshape(B, OC, d, d)


def e2e_reference(A, W1, b1, W2, b2, *, in_channel, out_channel, nodes, d):
    """Pure-JAX reference mirroring the PyTorch forward (batched)."""
    C, OC = in_channel, out_channel
    B = A.size // (C * nodes * nodes)
    A4 = A.reshape(B, C, nodes, nodes).astype(jnp.float32)
    colp = jnp.einsum('bckj,ock->boj', A4,
                      W1.reshape(OC, C, d).astype(jnp.float32)) + b1[None, :, None]
    rowp = jnp.einsum('bcik,ock->boi', A4,
                      W2.reshape(OC, C, d).astype(jnp.float32)) + b2[None, :, None]
    return rowp[:, :, :, None] + colp[:, :, None, :]          # (B, OC, d, d)


if __name__ == "__main__":
    in_channel, out_channel = 4, 8
    nodes = d = 16
    cfg = dict(in_channel=in_channel, out_channel=out_channel, nodes=nodes, d=d)

    key = jax.random.PRNGKey(0)
    k_a, k_w1, k_b1, k_w2, k_b2, k_a2 = jax.random.split(key, 6)

    # Parameters with the shapes nn.Conv2d gives in __init__.
    W1 = 0.1 * jax.random.normal(k_w1, (out_channel, in_channel, d, 1), dtype=jnp.float32)
    b1 = 0.1 * jax.random.normal(k_b1, (out_channel,), dtype=jnp.float32)
    W2 = 0.1 * jax.random.normal(k_w2, (out_channel, in_channel, 1, d), dtype=jnp.float32)
    b2 = 0.1 * jax.random.normal(k_b2, (out_channel,), dtype=jnp.float32)

    # Module-parity check (the PyTorch forward hard-codes batch 1).
    A = jax.random.normal(k_a, (1, in_channel, nodes, nodes), dtype=jnp.float32)
    out = jax.block_until_ready(e2e_forward(A, W1, b1, W2, b2, **cfg))
    ref = e2e_reference(A, W1, b1, W2, b2, **cfg)
    assert out.shape == (1, out_channel, d, d)
    assert jnp.allclose(out, ref, atol=1e-4, rtol=1e-4), "mismatch vs reference (B=1)"

    # Batched path (parallel grid axis; uses both TCs on v7x when B > 1).
    A2 = jax.random.normal(k_a2, (2, in_channel, nodes, nodes), dtype=jnp.float32)
    out2 = jax.block_until_ready(e2e_forward(A2, W1, b1, W2, b2, **cfg))
    ref2 = e2e_reference(A2, W1, b1, W2, b2, **cfg)
    assert out2.shape == (2, out_channel, d, d)
    assert jnp.allclose(out2, ref2, atol=1e-4, rtol=1e-4), "mismatch vs reference (B=2)"

    print("KERNEL_OK")
</pallas_src>

<mosaic_0001>
module attributes {stable_mosaic.version = 11 : i64} {
  func.func @_e2e_kernel(%arg0: i32, %arg1: memref<16x64xf32, #tpu.memory_space<vmem>>, %arg2: memref<8x1xf32, #tpu.memory_space<vmem>>, %arg3: memref<32x256xf32, #tpu.memory_space<vmem>>, %arg4: memref<1x2x64x16xf32, #tpu.memory_space<vmem>>, %arg5: memref<1x8x256xf32, #tpu.memory_space<vmem>>) attributes {dimension_semantics = [#tpu.dimension_semantics<parallel>], iteration_bounds = array<i64: 1>, scalar_prefetch = 0 : i64, scratch_operands = 0 : i64, tpu.core_type = #tpu.core_type<tc>, window_params = [{pipeline_mode = #tpu.pipeline_mode<synchronous>, transform_indices = @transform_0, window_bounds = array<i64: 16, 64>}, {pipeline_mode = #tpu.pipeline_mode<synchronous>, transform_indices = @transform_1, window_bounds = array<i64: 8, 1>}, {pipeline_mode = #tpu.pipeline_mode<synchronous>, transform_indices = @transform_2, window_bounds = array<i64: 32, 256>}, {transform_indices = @transform_3, window_bounds = array<i64: 1, 2, 64, 16>}, {transform_indices = @transform_4, window_bounds = array<i64: 1, 8, 256>}]} {
    %c0 = arith.constant 0 : index
    %c0_0 = arith.constant 0 : index
    %0 = vector.load %arg1[%c0, %c0_0] : memref<16x64xf32, #tpu.memory_space<vmem>>, vector<16x64xf32>
    %c0_1 = arith.constant 0 : index
    %c0_2 = arith.constant 0 : index
    %c0_3 = arith.constant 0 : index
    %c0_4 = arith.constant 0 : index
    %1 = vector.load %arg4[%c0_1, %c0_2, %c0_3, %c0_4] : memref<1x2x64x16xf32, #tpu.memory_space<vmem>>, vector<1x1x64x16xf32>
    %2 = vector.shape_cast %1 : vector<1x1x64x16xf32> to vector<64x16xf32>
    %c0_5 = arith.constant 0 : index
    %c1 = arith.constant 1 : index
    %c0_6 = arith.constant 0 : index
    %c0_7 = arith.constant 0 : index
    %3 = vector.load %arg4[%c0_5, %c1, %c0_6, %c0_7] : memref<1x2x64x16xf32, #tpu.memory_space<vmem>>, vector<1x1x64x16xf32>
    %4 = vector.shape_cast %3 : vector<1x1x64x16xf32> to vector<64x16xf32>
    %5 = vector.extract_strided_slice %0 {offsets = [0, 0], sizes = [8, 64], strides = [1, 1]} : vector<16x64xf32> to vector<8x64xf32>
    %cst = arith.constant dense<0.000000e+00> : vector<8x16xf32>
    %6 = tpu.matmul %5, %2, %cst {dimension_numbers = #tpu.dot_dimension_numbers<[1], [0], [0], [1], [0, 0, 1, 1], [], []>} : vector<8x64xf32>, vector<64x16xf32>, vector<8x16xf32> -> vector<8x16xf32>
    %c0_8 = arith.constant 0 : index
    %c0_9 = arith.constant 0 : index
    %7 = vector.load %arg2[%c0_8, %c0_9] : memref<8x1xf32, #tpu.memory_space<vmem>>, vector<8x1xf32>
    %8 = vector.broadcast %7 : vector<8x1xf32> to vector<8x16xf32>
    %9 = arith.addf %6, %8 : vector<8x16xf32>
    %10 = vector.extract_strided_slice %0 {offsets = [8, 0], sizes = [8, 64], strides = [1, 1]} : vector<16x64xf32> to vector<8x64xf32>
    %cst_10 = arith.constant dense<0.000000e+00> : vector<8x16xf32>
    %11 = tpu.matmul %10, %4, %cst_10 {dimension_numbers = #tpu.dot_dimension_numbers<[1], [0], [0], [1], [0, 0, 1, 1], [], []>} : vector<8x64xf32>, vector<64x16xf32>, vector<8x16xf32> -> vector<8x16xf32>
    %12 = tpu.concatenate %9, %11 in 1 : vector<8x16xf32>, vector<8x16xf32> -> vector<8x32xf32>
    %c0_11 = arith.constant 0 : index
    %c0_12 = arith.constant 0 : index
    %13 = vector.load %arg3[%c0_11, %c0_12] : memref<32x256xf32, #tpu.memory_space<vmem>>, vector<32x256xf32>
    %cst_13 = arith.constant dense<0.000000e+00> : vector<8x256xf32>
    %14 = tpu.matmul %12, %13, %cst_13 {dimension_numbers = #tpu.dot_dimension_numbers<[1], [0], [0], [1], [0, 0, 1, 1], [], []>} : vector<8x32xf32>, vector<32x256xf32>, vector<8x256xf32> -> vector<8x256xf32>
    %c0_14 = arith.constant 0 : index
    %c0_15 = arith.constant 0 : index
    %c0_16 = arith.constant 0 : index
    %15 = vector.load %arg5[%c0_14, %c0_15, %c0_16] : memref<1x8x256xf32, #tpu.memory_space<vmem>>, vector<1x8x256xf32>
    %16 = vector.shape_cast %15 : vector<1x8x256xf32> to vector<8x256xf32>
    %17 = vector.shape_cast %14 : vector<8x256xf32> to vector<1x8x256xf32>
    tpu.vector_store %arg5[%c0_14, %c0_15, %c0_16], %17 {strides = array<i32>} : memref<1x8x256xf32, #tpu.memory_space<vmem>>, vector<1x8x256xf32>,
    return
  }
  func.func @transform_0(%arg0: i32) -> (i32, i32) {
    %c0_i32 = arith.constant 0 : i32
    %c0_i32_0 = arith.constant 0 : i32
    %c0_i32_1 = arith.constant 0 : i32
    return %c0_i32, %c0_i32_0 : i32, i32
  }
  func.func @transform_1(%arg0: i32) -> (i32, i32) {
    %c0_i32 = arith.constant 0 : i32
    %c0_i32_0 = arith.constant 0 : i32
    %c0_i32_1 = arith.constant 0 : i32
    return %c0_i32, %c0_i32_0 : i32, i32
  }
  func.func @transform_2(%arg0: i32) -> (i32, i32) {
    %c0_i32 = arith.constant 0 : i32
    %c0_i32_0 = arith.constant 0 : i32
    %c0_i32_1 = arith.constant 0 : i32
    return %c0_i32, %c0_i32_0 : i32, i32
  }
  func.func @transform_3(%arg0: i32) -> (i32, i32, i32, i32) {
    %c0_i32 = arith.constant 0 : i32
    %c0_i32_0 = arith.constant 0 : i32
    %c0_i32_1 = arith.constant 0 : i32
    %c0_i32_2 = arith.constant 0 : i32
    return %arg0, %c0_i32, %c0_i32_0, %c0_i32_1 : i32, i32, i32, i32
  }
  func.func @transform_4(%arg0: i32) -> (i32, i32, i32) {
    %c0_i32 = arith.constant 0 : i32
    %c0_i32_0 = arith.constant 0 : i32
    %c0_i32_1 = arith.constant 0 : i32
    return %arg0, %c0_i32, %c0_i32_0 : i32, i32, i32
  }
}

</mosaic_0001>

<llo_original>
// kernel: e2e_forward.1
$region0: #{e2e_forward.1}
  #allocation0 [shape = 'u32[]', space=smem, size = 0x4, offset = 0x4, fixed_abs, tag = 'smem constant byte address 0x4 - core index']
  #allocation1 [shape = 'u32[144,128]{1,0:T(1,128)}', space=vmem, size = 0x12000, scoped, tag = 'internal scratch']
  %s0 = inlined_call_operand.vmem [shape: f32[16,64], index: 0, kind: input, shape index: {}]
  %s1 = inlined_call_operand.vmem [shape: f32[8,1], index: 1, kind: input, shape index: {}]
  %s2 = inlined_call_operand.vmem [shape: f32[32,256], index: 2, kind: input, shape index: {}]
  %s3 = inlined_call_operand.vmem [shape: f32[1,2,64,16], index: 3, kind: input, shape index: {}]
  %s4 = inlined_call_operand.vmem [shape: f32[1,8,256], index: 4, kind: output, shape index: {}]
  %s5 = sld [smem:[#allocation0]]
  $region26: #{e2e_forward.1} parent=0
    _
  %s7 = ssub.s32 1, %s5
  %s8 = scalar_select 0, %s7, %s5
  // Predicated region
  $region2: #{e2e_forward.1} parent=0 // pred_check
    _
  $region3: #{e2e_forward.1} parent=0 // pred_check_branch
    %10 = sbr.rel (0) target = $region5
  $region4: #{e2e_forward.1} parent=0 // pred_region
    _
  $region5: #{e2e_forward.1} parent=0 // pred_fallthru
    _
  // Predicated region
  $region6: #{e2e_forward.1} parent=0 // pred_check
    _
  $region7: #{e2e_forward.1} parent=0 // pred_check_branch
    %12 = sbr.rel (0) target = $region9
  $region8: #{e2e_forward.1} parent=0 // pred_region
    _
  $region9: #{e2e_forward.1} parent=0 // pred_fallthru
    _
  // Predicated region
  $region10: #{e2e_forward.1} parent=0 // pred_check
    _
  $region11: #{e2e_forward.1} parent=0 // pred_check_branch
    %14 = sbr.rel (0) target = $region13
  $region12: #{e2e_forward.1} parent=0 // pred_region
    _
  $region13: #{e2e_forward.1} parent=0 // pred_fallthru
    _
  // Predicated region
  $region14: #{e2e_forward.1} parent=0 // pred_check
    _
  $region15: #{e2e_forward.1} parent=0 // pred_check_branch
    %16 = sbr.rel (0) target = $region17
  $region16: #{e2e_forward.1} parent=0 // pred_region
    _
  $region17: #{e2e_forward.1} parent=0 // pred_fallthru
    _
  %v17 = vld [vmem:[%s0] sm:$0xff]
  %v18 = vld [vmem:[%s0 + $0x8] sm:$0xff]
  %v19 = vld [vmem:[%s3] sm:$0xff]
  %v20 = vld [vmem:[%s3 + $0x8] sm:$0xff]
  %v21 = vld [vmem:[%s3 + $0x10] sm:$0xff]
  %v22 = vld [vmem:[%s3 + $0x18] sm:$0xff]
  %v23 = vld [vmem:[%s3 + $0x20] sm:$0xff]
  %v24 = vld [vmem:[%s3 + $0x28] sm:$0xff]
  %v25 = vld [vmem:[%s3 + $0x30] sm:$0xff]
  %v26 = vld [vmem:[%s3 + $0x38] sm:$0xff]
  %s27 = scalar_lea.vmem %s3, 64
  %v28 = vld [vmem:[%s27] sm:$0xff]
  %v29 = vld [vmem:[%s27 + $0x8] sm:$0xff]
  %v30 = vld [vmem:[%s27 + $0x10] sm:$0xff]
  %v31 = vld [vmem:[%s27 + $0x18] sm:$0xff]
  %v32 = vld [vmem:[%s27 + $0x20] sm:$0xff]
  %v33 = vld [vmem:[%s27 + $0x28] sm:$0xff]
  %v34 = vld [vmem:[%s27 + $0x30] sm:$0xff]
  %v35 = vld [vmem:[%s27 + $0x38] sm:$0xff]
  %v36 = vld [vmem:[%s1] sm:$0xff]
  %38 = vset.pattern.permute.xlu0 0
  %39 = vperm.xlu0 %38, %v36
  %v40 = vpop.permute.xlu0 %39
  %vm42 = vcmask 523264
  %v44 = vsel %vm42, %v17, 0
  %46 = vmatprep.subr.mxu0 0.0
  %47 = vmatpush1.msra.mxu0 %v19
  %48 = vmatprep.subr.mxu0 0.0
  %49 = vmatpush1.msra.mxu0 %v20
  %50 = vmatprep.subr.mxu0 0.0
  %51 = vmatpush1.msra.mxu0 %v21
  %52 = vmatprep.subr.mxu0 0.0
  %53 = vmatpush1.msra.mxu0 %v22
  %54 = vmatprep.subr.mxu0 0.0
  %55 = vmatpush1.msra.mxu0 %v23
  %56 = vmatprep.subr.mxu0 0.0
  %57 = vmatpush1.msra.mxu0 %v24
  %58 = vmatprep.subr.mxu0 0.0
  %59 = vmatpush1.msra.mxu0 %v25
  %60 = vmatprep.subr.mxu0 0.0
  %61 = vmatpush1.msra.mxu0 %v26
  %62 = vmatprep.subr.mxu0 0.0
  %63 = vmatpush1.msra.mxu0 0.0
  %64 = vmatprep.subr.mxu0 0.0
  %65 = vmatpush1.msra.mxu0 0.0
  %66 = vmatprep.subr.mxu0 0.0
  %67 = vmatpush1.msra.mxu0 0.0
  %68 = vmatprep.subr.mxu0 0.0
  %69 = vmatpush1.msra.mxu0 0.0
  %70 = vmatprep.subr.mxu0 0.0
  %71 = vmatpush1.msra.mxu0 0.0
  %72 = vmatprep.subr.mxu0 0.0
  %73 = vmatpush1.msra.mxu0 0.0
  %74 = vmatprep.subr.mxu0 0.0
  %75 = vmatpush1.msra.mxu0 0.0
  %76 = vmatprep.subr.mxu0 0.0
  %77 = vmatpush1.msra.mxu0 0.0
  %78 = vmatprep.subr.mxu0 0.0
  %79 = vmatpush1.msra.mxu0 0.0
  %80 = vmatprep.subr.mxu0 0.0
  %81 = vmatpush1.msra.mxu0 0.0
  %82 = vmatprep.subr.mxu0 0.0
  %83 = vmatpush1.msra.mxu0 0.0
  %84 = vmatprep.subr.mxu0 0.0
  %85 = vmatpush1.msra.mxu0 0.0
  %86 = vmatprep.subr.mxu0 0.0
  %87 = vmatpush1.msra.mxu0 0.0
  %88 = vmatprep.subr.mxu0 0.0
  %89 = vmatpush1.msra.mxu0 0.0
  %90 = vmatprep.subr.mxu0 0.0
  %91 = vmatpush1.msra.mxu0 0.0
  %92 = vmatprep.subr.mxu0 0.0
  %93 = vmatpush1.msra.mxu0 0.0
  %94 = vmatprep.subr.mxu0 0.0
  %95 = vmatpush1.msra.mxu0 0.0
  %96 = vmatprep.subr.mxu0 0.0
  %97 = vmatpush1.msra.mxu0 0.0
  %98 = vmatprep.subr.mxu0 0.0
  %99 = vmatpush1.msra.mxu0 0.0
  %100 = vmatprep.subr.mxu0 0.0
  %101 = vmatpush1.msra.mxu0 0.0
  %102 = vmatprep.subr.mxu0 0.0
  %103 = vmatpush1.msra.mxu0 0.0
  %104 = vmatprep.subr.mxu0 0.0
  %105 = vmatpush1.msra.mxu0 0.0
  %106 = vmatprep.subr.mxu0 0.0
  %107 = vmatpush1.msra.mxu0 0.0
  %108 = vmatprep.subr.mxu0 0.0
  %109 = vmatpush1.msra.mxu0 0.0
  %110 = vmatprep.mubr.f32.mxu0 0.0
  %111 = vmatmul.mubr.f32.gmra.mrb[0].mxu0 %v44
  %v112 = vpop.f32.mrb[0].mxu0
  %v113 = vadd.f32 %v40, %v112
  %v114 = vpop.f32.mrb[0].mxu0
  %115 = vdwg.mxu0
  %v117 = vsel %vm42, %v18, 0
  %119 = vmatprep.subr.mxu0 0.0
  %120 = vmatpush1.msra.mxu0 %v28
  %121 = vmatprep.subr.mxu0 0.0
  %122 = vmatpush1.msra.mxu0 %v29
  %123 = vmatprep.subr.mxu0 0.0
  %124 = vmatpush1.msra.mxu0 %v30
  %125 = vmatprep.subr.mxu0 0.0
  %126 = vmatpush1.msra.mxu0 %v31
  %127 = vmatprep.subr.mxu0 0.0
  %128 = vmatpush1.msra.mxu0 %v32
  %129 = vmatprep.subr.mxu0 0.0
  %130 = vmatpush1.msra.mxu0 %v33
  %131 = vmatprep.subr.mxu0 0.0
  %132 = vmatpush1.msra.mxu0 %v34
  %133 = vmatprep.subr.mxu0 0.0
  %134 = vmatpush1.msra.mxu0 %v35
  %135 = vmatprep.subr.mxu0 0.0
  %136 = vmatpush1.msra.mxu0 0.0
  %137 = vmatprep.subr.mxu0 0.0
  %138 = vmatpush1.msra.mxu0 0.0
  %139 = vmatprep.subr.mxu0 0.0
  %140 = vmatpush1.msra.mxu0 0.0
  %141 = vmatprep.subr.mxu0 0.0
  %142 = vmatpush1.msra.mxu0 0.0
  %143 = vmatprep.subr.mxu0 0.0
  %144 = vmatpush1.msra.mxu0 0.0
  %145 = vmatprep.subr.mxu0 0.0
  %146 = vmatpush1.msra.mxu0 0.0
  %147 = vmatprep.subr.mxu0 0.0
  %148 = vmatpush1.msra.mxu0 0.0
  %149 = vmatprep.subr.mxu0 0.0
  %150 = vmatpush1.msra.mxu0 0.0
  %151 = vmatprep.subr.mxu0 0.0
  %152 = vmatpush1.msra.mxu0 0.0
  %153 = vmatprep.subr.mxu0 0.0
  %154 = vmatpush1.msra.mxu0 0.0
  %155 = vmatprep.subr.mxu0 0.0
  %156 = vmatpush1.msra.mxu0 0.0
  %157 = vmatprep.subr.mxu0 0.0
  %158 = vmatpush1.msra.mxu0 0.0
  %159 = vmatprep.subr.mxu0 0.0
  %160 = vmatpush1.msra.mxu0 0.0
  %161 = vmatprep.subr.mxu0 0.0
  %162 = vmatpush1.msra.mxu0 0.0
  %163 = vmatprep.subr.mxu0 0.0
  %164 = vmatpush1.msra.mxu0 0.0
  %165 = vmatprep.subr.mxu0 0.0
  %166 = vmatpush1.msra.mxu0 0.0
  %167 = vmatprep.subr.mxu0 0.0
  %168 = vmatpush1.msra.mxu0 0.0
  %169 = vmatprep.subr.mxu0 0.0
  %170 = vmatpush1.msra.mxu0 0.0
  %171 = vmatprep.subr.mxu0 0.0
  %172 = vmatpush1.msra.mxu0 0.0
  %173 = vmatprep.subr.mxu0 0.0
  %174 = vmatpush1.msra.mxu0 0.0
  %175 = vmatprep.subr.mxu0 0.0
  %176 = vmatpush1.msra.mxu0 0.0
  %177 = vmatprep.subr.mxu0 0.0
  %178 = vmatpush1.msra.mxu0 0.0
  %179 = vmatprep.subr.mxu0 0.0
  %180 = vmatpush1.msra.mxu0 0.0
  %181 = vmatprep.subr.mxu0 0.0
  %182 = vmatpush1.msra.mxu0 0.0
  %183 = vmatprep.mubr.f32.mxu0 0.0
  %184 = vmatmul.mubr.f32.gmra.mrb[0].mxu0 %v117
  %v185 = vpop.f32.mrb[0].mxu0
  %v186 = vadd.f32 0.0, %v185
  %v187 = vpop.f32.mrb[0].mxu0
  %188 = vdwg.mxu0
  %190 = vrot.lane.b32.xlu0 %v186, 16
  %v191 = vpop.permute.xlu0 %190
  %vm193 = vcmask 130048
  %v194 = vsel %vm193, %v113, %v191
  %v195 = vld [vmem:[%s2] sm:$0xff]
  %v196 = vld [vmem:[%s2 + $0x8] sm:$0xff]
  %v197 = vld [vmem:[%s2 + $0x10] sm:$0xff]
  %v198 = vld [vmem:[%s2 + $0x18] sm:$0xff]
  %v199 = vld [vmem:[%s2 + $0x20] sm:$0xff]
  %v200 = vld [vmem:[%s2 + $0x28] sm:$0xff]
  %v201 = vld [vmem:[%s2 + $0x30] sm:$0xff]
  %v202 = vld [vmem:[%s2 + $0x38] sm:$0xff]
  %vm203 = vcmask 261120
  %v205 = vsel %vm203, %v194, 0
  %207 = vmatprep.subr.mxu0 %v196
  %208 = vmatpush1.msra.mxu0 %v195
  %209 = vmatprep.subr.mxu0 %v198
  %210 = vmatpush1.msra.mxu0 %v197
  %211 = vmatprep.subr.mxu0 %v200
  %212 = vmatpush1.msra.mxu0 %v199
  %213 = vmatprep.subr.mxu0 %v202
  %214 = vmatpush1.msra.mxu0 %v201
  %215 = vmatprep.subr.mxu0 0.0
  %216 = vmatpush1.msra.mxu0 0.0
  %217 = vmatprep.subr.mxu0 0.0
  %218 = vmatpush1.msra.mxu0 0.0
  %219 = vmatprep.subr.mxu0 0.0
  %220 = vmatpush1.msra.mxu0 0.0
  %221 = vmatprep.subr.mxu0 0.0
  %222 = vmatpush1.msra.mxu0 0.0
  %223 = vmatprep.subr.mxu0 0.0
  %224 = vmatpush1.msra.mxu0 0.0
  %225 = vmatprep.subr.mxu0 0.0
  %226 = vmatpush1.msra.mxu0 0.0
  %227 = vmatprep.subr.mxu0 0.0
  %228 = vmatpush1.msra.mxu0 0.0
  %229 = vmatprep.subr.mxu0 0.0
  %230 = vmatpush1.msra.mxu0 0.0
  %231 = vmatprep.subr.mxu0 0.0
  %232 = vmatpush1.msra.mxu0 0.0
  %233 = vmatprep.subr.mxu0 0.0
  %234 = vmatpush1.msra.mxu0 0.0
  %235 = vmatprep.subr.mxu0 0.0
  %236 = vmatpush1.msra.mxu0 0.0
  %237 = vmatprep.subr.mxu0 0.0
  %238 = vmatpush1.msra.mxu0 0.0
  %239 = vmatprep.subr.mxu0 0.0
  %240 = vmatpush1.msra.mxu0 0.0
  %241 = vmatprep.subr.mxu0 0.0
  %242 = vmatpush1.msra.mxu0 0.0
  %243 = vmatprep.subr.mxu0 0.0
  %244 = vmatpush1.msra.mxu0 0.0
  %245 = vmatprep.subr.mxu0 0.0
  %246 = vmatpush1.msra.mxu0 0.0
  %247 = vmatprep.subr.mxu0 0.0
  %248 = vmatpush1.msra.mxu0 0.0
  %249 = vmatprep.subr.mxu0 0.0
  %250 = vmatpush1.msra.mxu0 0.0
  %251 = vmatprep.subr.mxu0 0.0
  %252 = vmatpush1.msra.mxu0 0.0
  %253 = vmatprep.subr.mxu0 0.0
  %254 = vmatpush1.msra.mxu0 0.0
  %255 = vmatprep.subr.mxu0 0.0
  %256 = vmatpush1.msra.mxu0 0.0
  %257 = vmatprep.subr.mxu0 0.0
  %258 = vmatpush1.msra.mxu0 0.0
  %259 = vmatprep.subr.mxu0 0.0
  %260 = vmatpush1.msra.mxu0 0.0
  %261 = vmatprep.subr.mxu0 0.0
  %262 = vmatpush1.msra.mxu0 0.0
  %263 = vmatprep.subr.mxu0 0.0
  %264 = vmatpush1.msra.mxu0 0.0
  %265 = vmatprep.subr.mxu0 0.0
  %266 = vmatpush1.msra.mxu0 0.0
  %267 = vmatprep.subr.mxu0 0.0
  %268 = vmatpush1.msra.mxu0 0.0
  %269 = vmatprep.subr.mxu0 0.0
  %270 = vmatpush1.msra.mxu0 0.0
  %271 = vmatprep.mubr.f32.mxu0 0.0
  %272 = vmatmul.mubr.f32.gmra.mrb[0].mxu0 %v205
  %v273 = vpop.f32.mrb[0].mxu0
  %v274 = vadd.f32 0.0, %v273
  %v275 = vpop.f32.mrb[0].mxu0
  %v276 = vadd.f32 0.0, %v275
  %277 = vdwg.mxu0
  %278 = vst [vmem:[%s4] sm:$0xff] %v274
  %279 = vst [vmem:[%s4 + $0x8] sm:$0xff] %v276
  // Predicated region
  $region18: #{e2e_forward.1} parent=0 // pred_check
    _
  $region19: #{e2e_forward.1} parent=0 // pred_check_branch
    %281 = sbr.rel (0) target = $region21
  $region20: #{e2e_forward.1} parent=0 // pred_region
    _
  $region21: #{e2e_forward.1} parent=0 // pred_fallthru
    _
  // Predicated region
  $region22: #{e2e_forward.1} parent=0 // pred_check
    _
  $region23: #{e2e_forward.1} parent=0 // pred_check_branch
    %283 = sbr.rel (0) target = $region25
  $region24: #{e2e_forward.1} parent=0 // pred_region
    _
  $region25: #{e2e_forward.1} parent=0 // pred_fallthru
    _

</llo_original>
